<compile_context>
chip_gen: v7x
topology: tpu7x:2x2x1
jax: 0.10.0
libtpu: 0.0.40
codegen_flags: <defaults>
</compile_context>

<pallas_src>
import numpy as np

import jax
import jax.numpy as jnp
from jax.experimental import pallas as pl
from jax.experimental.pallas import tpu as pltpu


def _drop_path_kernel(scale_ref, x_ref, o_ref):
    """scale_ref: (TB, 1); x_ref / o_ref: (TB, TILE_F). Native-dtype multiply."""
    o_ref[...] = x_ref[...] * scale_ref[...]


def _round_down(v, align):
    return (v // align) * align


def _round_up(v, align):
    return ((v + align - 1) // align) * align


def _pick_aligned_tile(total, align, max_elems):
    """Largest tile <= max(align, max_elems) that is a multiple of `align`.

    Prefers an exact divisor of `total` (no ragged final block); otherwise
    returns the largest aligned value within the budget — the grid uses
    pl.cdiv, so Pallas handles the ragged last block.  Never exceeds the
    budget by more than one alignment unit.
    """
    cap = max(align, _round_down(max_elems, align))
    best = None
    t = align
    while t <= cap:
        if total % t == 0:
            best = t
        t += align
    return best if best is not None else cap


def _plan_tiles(B, F, dtype_bytes):
    """Choose (tb, tile_f) block shape for the (B, F) slab."""
    lane = 128
    sublane = max(8, 32 // dtype_bytes)          # f32 -> 8, bf16 -> 16, int8 -> 32
    budget_elems = (2 << 20) // dtype_bytes      # ~2 MiB per block buffer

    # --- F (lane) tile first: long contiguous DMAs along the last dim ---
    if F <= budget_elems:
        tile_f = F                               # full extent (always legal)
    else:
        tile_f = _pick_aligned_tile(F, lane, budget_elems)

    # --- B (sublane) tile within the remaining budget ---
    max_tb = max(1, budget_elems // tile_f)
    if B <= max_tb:
        tb = B                                   # full extent (always legal)
    elif max_tb >= sublane:
        tb = _pick_aligned_tile(B, sublane, max_tb)
    else:
        # Need at least one fully packed sublane group of rows; shrink tile_f.
        tb = min(B, sublane)                     # full extent or sublane-aligned
        tile_f = _pick_aligned_tile(F, lane, max(lane, budget_elems // tb))

    # --- Ensure >= 2 blocks so v7x megacore can split the work across TCs ---
    if pl.cdiv(B, tb) * pl.cdiv(F, tile_f) == 1:
        if F >= 2 * lane:
            tile_f = _round_up(pl.cdiv(F, 2), lane)
        elif B >= 2 * sublane:
            tb = _round_up(pl.cdiv(B, 2), sublane)
        # else: the whole problem is tiny; a single block is fine.

    return tb, tile_f


def drop_path(x, drop_prob: float = 0.0, training: bool = False, key=None):
    """JAX/Pallas equivalent of the PyTorch drop_path function."""
    if drop_prob == 0.0 or not training:
        return x
    drop_prob = float(drop_prob)
    if not 0.0 <= drop_prob <= 1.0:
        raise ValueError(f"drop_prob must be in [0, 1], got {drop_prob}")
    if drop_prob >= 1.0:
        return jnp.zeros_like(x)                 # every sample dropped
    if key is None:
        raise ValueError("drop_path: a PRNG key is required in training mode")

    keep_prob = 1.0 - drop_prob
    B = x.shape[0]
    F = int(np.prod(x.shape[1:]))
    xf = x.reshape(B, F)

    # Same math as PyTorch: mask = floor(keep_prob + U[0,1)); out = x/keep_prob * mask.
    # (RNG stream differs from torch.rand — expected.)  Computed in f32, cast once.
    u = jax.random.uniform(key, (B, 1), dtype=jnp.float32)
    scale = (jnp.floor(jnp.float32(keep_prob) + u) / jnp.float32(keep_prob)).astype(x.dtype)

    dtype_bytes = jnp.dtype(x.dtype).itemsize
    tb, tile_f = _plan_tiles(B, F, dtype_bytes)
    grid = (pl.cdiv(B, tb), pl.cdiv(F, tile_f))  # F innermost: scale block stays resident

    out = pl.pallas_call(
        _drop_path_kernel,
        out_shape=jax.ShapeDtypeStruct((B, F), x.dtype),
        grid=grid,
        in_specs=[
            pl.BlockSpec((tb, 1), lambda i, j: (i, 0)),          # per-sample scale
            pl.BlockSpec((tb, tile_f), lambda i, j: (i, j)),     # activations
        ],
        out_specs=pl.BlockSpec((tb, tile_f), lambda i, j: (i, j)),
        compiler_params=pltpu.CompilerParams(
            dimension_semantics=("parallel", "parallel"),
            vmem_limit_bytes=32 << 20,
        ),
    )(scale, xf)
    return out.reshape(x.shape)


class DropPath:
    """Drop paths (Stochastic Depth) per sample.  No learnable parameters."""

    def __init__(self, drop_prob=None):
        self.drop_prob = 0.0 if drop_prob is None else float(drop_prob)
        self.training = True

    def __call__(self, x, key=None):
        return drop_path(x, self.drop_prob, self.training, key=key)


if __name__ == "__main__":
    key = jax.random.PRNGKey(0)
    B, C, H, W = 2, 4, 16, 16
    x = jax.random.normal(key, (B, C, H, W), dtype=jnp.float32)

    # eval / drop_prob==0 path: identity (no kernel launch)
    mod_eval = DropPath(drop_prob=0.2)
    mod_eval.training = False
    y_eval = jax.block_until_ready(mod_eval(x))
    assert jnp.allclose(y_eval, x)

    # training path: Pallas kernel with per-sample stochastic depth
    mod = DropPath(drop_prob=0.5)
    mod.training = True
    train_key = jax.random.PRNGKey(42)
    y = jax.block_until_ready(mod(x, key=train_key))

    # semantic check: every sample is either all-zero or x / keep_prob
    keep_prob = 1.0 - mod.drop_prob
    for b in range(B):
        row = y[b]
        is_zero = bool(jnp.all(row == 0.0))
        is_scaled = bool(jnp.allclose(row, x[b] / keep_prob, rtol=1e-5, atol=1e-5))
        assert is_zero or is_scaled, "per-sample DropPath semantics violated"

    # ragged-shape check (F=300 not a multiple of 128, B=5 not a multiple of 8)
    x2 = jax.random.normal(jax.random.PRNGKey(1), (5, 3, 10, 10), dtype=jnp.float32)
    key2 = jax.random.PRNGKey(7)
    y2 = jax.block_until_ready(drop_path(x2, 0.3, training=True, key=key2))
    kp2 = jnp.float32(1.0 - 0.3)
    mask2 = jnp.floor(kp2 + jax.random.uniform(key2, (5, 1), dtype=jnp.float32))
    ref2 = x2 * (mask2 / kp2).reshape(5, 1, 1, 1)
    assert jnp.allclose(y2, ref2, rtol=1e-5, atol=1e-5), "ragged-shape DropPath mismatch"

    # drop_prob == 1.0 guard: all samples dropped, no NaNs
    y_all = jax.block_until_ready(drop_path(x, 1.0, training=True, key=train_key))
    assert jnp.all(y_all == 0.0)

    print("KERNEL_OK")
</pallas_src>

<mosaic_0001>
module attributes {stable_mosaic.version = 11 : i64} {
  func.func @_drop_path_kernel(%arg0: i32, %arg1: i32, %arg2: memref<2x1xf32, #tpu.memory_space<vmem>>, %arg3: memref<2x512xf32, #tpu.memory_space<vmem>>, %arg4: memref<2x512xf32, #tpu.memory_space<vmem>>) attributes {dimension_semantics = [#tpu.dimension_semantics<parallel>, #tpu.dimension_semantics<parallel>], iteration_bounds = array<i64: 1, 2>, scalar_prefetch = 0 : i64, scratch_operands = 0 : i64, tpu.core_type = #tpu.core_type<tc>, window_params = [{transform_indices = @transform_0, window_bounds = array<i64: 2, 1>}, {transform_indices = @transform_1, window_bounds = array<i64: 2, 512>}, {transform_indices = @transform_2, window_bounds = array<i64: 2, 512>}]} {
    %c0 = arith.constant 0 : index
    %c0_0 = arith.constant 0 : index
    %0 = vector.load %arg3[%c0, %c0_0] : memref<2x512xf32, #tpu.memory_space<vmem>>, vector<2x512xf32>
    %c0_1 = arith.constant 0 : index
    %c0_2 = arith.constant 0 : index
    %1 = vector.load %arg2[%c0_1, %c0_2] : memref<2x1xf32, #tpu.memory_space<vmem>>, vector<2x1xf32>
    %2 = vector.broadcast %1 : vector<2x1xf32> to vector<2x512xf32>
    %3 = arith.mulf %0, %2 : vector<2x512xf32>
    %c0_3 = arith.constant 0 : index
    %c0_4 = arith.constant 0 : index
    %4 = vector.load %arg4[%c0_3, %c0_4] : memref<2x512xf32, #tpu.memory_space<vmem>>, vector<2x512xf32>
    tpu.vector_store %arg4[%c0_3, %c0_4], %3 {strides = array<i32>} : memref<2x512xf32, #tpu.memory_space<vmem>>, vector<2x512xf32>,
    return
  }
  func.func @transform_0(%arg0: i32, %arg1: i32) -> (i32, i32) {
    %c0_i32 = arith.constant 0 : i32
    %c0_i32_0 = arith.constant 0 : i32
    return %arg0, %c0_i32 : i32, i32
  }
  func.func @transform_1(%arg0: i32, %arg1: i32) -> (i32, i32) {
    %c0_i32 = arith.constant 0 : i32
    return %arg0, %arg1 : i32, i32
  }
  func.func @transform_2(%arg0: i32, %arg1: i32) -> (i32, i32) {
    %c0_i32 = arith.constant 0 : i32
    return %arg0, %arg1 : i32, i32
  }
}

</mosaic_0001>

<llo_original>
// kernel: tpu_custom_call.1
$region0: #{tpu_custom_call.1}
  #allocation0 [shape = 'u32[]', space=smem, size = 0x4, offset = 0x4, fixed_abs, tag = 'smem constant byte address 0x4 - core index']
  #allocation1 [shape = 'u32[144,128]{1,0:T(1,128)}', space=vmem, size = 0x12000, scoped, tag = 'internal scratch']
  %s0 = inlined_call_operand.vmem [shape: f32[2,1], index: 0, kind: input, shape index: {}]
  %s1 = inlined_call_operand.hbm [shape: f32[2,1024], index: 1, kind: input, shape index: {}]
  %s2 = inlined_call_operand.hbm [shape: f32[2,1024], index: 2, kind: output, shape index: {}]
  %s3 = sld [smem:[#allocation0]]
  $region45: #{tpu_custom_call.1} parent=0
    _
  %s5 = ssub.s32 1, %s3
  %s6 = scalar_select 0, %s5, %s3
  $region1: #{tpu_custom_call.1} parent=0
    #allocation2 [shape = 'u8[8192]{0}', space=vmem, size = 0x2000, scoped, tag = 'input window, operand 1']
    #allocation3 [shape = 's32[2]{0}', space=sflag, size = 0x8, scoped, tag = 'scoped memory for tpu_custom_call.1']
    #allocation4 [shape = 's32[2]{0}', space=sflag, size = 0x8, scoped, tag = 'scoped memory for tpu_custom_call.1']
    #allocation5 [shape = 'u8[8192]{0}', space=vmem, size = 0x2000, scoped, tag = 'output window, operand 0']
    %7 = vsyncpa [#allocation3], 0
    %s8 = scalar_lea.sflag [#allocation3], 1
    %9 = vsyncpa %s8, 0
    %10 = vsyncpa [#allocation4], 0
    %s11 = scalar_lea.sflag [#allocation4], 1
    %12 = vsyncpa %s11, 0
    loop: start=0, step=1, limit=4
    $region2: #{tpu_custom_call.1} parent=1 // loop_pre_header
      _
    $region3: #{tpu_custom_call.1} parent=1 // loop_header
      %s14 = sphi 0, %s18
      %p15 = scmp.ge.s32.totalorder %s14, 4
      %s21 = sphi 0, %s33
      %s22 = sphi 0, %s29
      %s23 = sphi 0, %s21
      %s24 = sphi 0, %s22
      %s25 = sphi 0, %s23
      %s26 = sphi 0, %s24
      %s36 = sphi 0, %s38
      %s39 = sphi 0, %s36
      %s40 = sphi 0, %s39
      %s56 = sphi 0, %s40
      %s64 = sphi 0, %s66
      %s67 = sphi 0, %s64
      %s68 = sphi 0, %s67
      %s84 = sphi 0, %s68
      %s92 = sphi 0, %s94
      %s95 = sphi 0, %s92
      %s96 = sphi 0, %s95
      %s112 = sphi 0, %s96
    $region4: #{tpu_custom_call.1} parent=1 // loop_header_branch
      %17 = sbr.rel (%p15) target = $region8
    $region5: #{tpu_custom_call.1} parent=1 // loop_body
      %s19 = ssub.s32 %s14, 1
      %s20 = ssub.s32 %s14, 2
      %s27 = sadd.s32 1, %s22
      %p28 = scmp.ge.s32.totalorder %s27, 2
      %s29 = scalar_select %p28, 0, %s27
      %s30 = sadd.s32 1, %s21
      %s31 = scalar_select %p28, %s30, %s21
      %p32 = scmp.ge.s32.totalorder %s31, 1
      %s33 = scalar_select %p32, 0, %s31
      %s34 = ssub.s32 %s21, %s33
      %p35 = scmp.eq.s32.totalorder %s34, 0
      %s37 = sadd.s32 %s36, 1
      %s38 = scalar_select %p35, %s36, %s37
      %p41 = pneg %p35
      %p42 = scmp.eq.s32.totalorder %s14, 1
      %p43 = por %p41, %p42
      %p44 = scmp.ne.s32.totalorder %s36, %s39
      %p45 = scmp.eq.s32.totalorder %s14, 0
      %p46 = por %p44, %p45
      %p47 = scmp.ne.s32.totalorder %s36, %s39
      %p48 = scmp.eq.s32.totalorder %s19, 1
      %p49 = por %p47, %p48
      %p50 = scmp.ne.s32.totalorder %s39, %s40
      %p51 = scmp.eq.s32.totalorder %s19, 0
      %p52 = por %p50, %p51
      %p53 = scmp.ne.s32.totalorder %s39, %s40
      %p54 = scmp.eq.s32.totalorder %s20, 1
      %p55 = por %p53, %p54
      %p57 = scmp.ne.s32.totalorder %s40, %s56
      %p58 = scmp.eq.s32.totalorder %s20, 0
      %p59 = por %p57, %p58
      %s60 = ssub.s32 %s21, %s33
      %s61 = ssub.s32 %s22, %s29
      %s62 = sor.u32 %s60, %s61
      %p63 = scmp.eq.s32.totalorder %s62, 0
      %s65 = sadd.s32 %s64, 1
      %s66 = scalar_select %p63, %s64, %s65
      %p69 = pneg %p63
      %p70 = scmp.eq.s32.totalorder %s14, 1
      %p71 = por %p69, %p70
      %p72 = scmp.ne.s32.totalorder %s64, %s67
      %p73 = scmp.eq.s32.totalorder %s14, 0
      %p74 = por %p72, %p73
      %p75 = scmp.ne.s32.totalorder %s64, %s67
      %p76 = scmp.eq.s32.totalorder %s19, 1
      %p77 = por %p75, %p76
      %p78 = scmp.ne.s32.totalorder %s67, %s68
      %p79 = scmp.eq.s32.totalorder %s19, 0
      %p80 = por %p78, %p79
      %p81 = scmp.ne.s32.totalorder %s67, %s68
      %p82 = scmp.eq.s32.totalorder %s20, 1
      %p83 = por %p81, %p82
      %p85 = scmp.ne.s32.totalorder %s68, %s84
      %p86 = scmp.eq.s32.totalorder %s20, 0
      %p87 = por %p85, %p86
      %s88 = ssub.s32 %s21, %s33
      %s89 = ssub.s32 %s22, %s29
      %s90 = sor.u32 %s88, %s89
      %p91 = scmp.eq.s32.totalorder %s90, 0
      %s93 = sadd.s32 %s92, 1
      %s94 = scalar_select %p91, %s92, %s93
      %p97 = pneg %p91
      %p98 = scmp.eq.s32.totalorder %s14, 1
      %p99 = por %p97, %p98
      %p100 = scmp.ne.s32.totalorder %s92, %s95
      %p101 = scmp.eq.s32.totalorder %s14, 0
      %p102 = por %p100, %p101
      %p103 = scmp.ne.s32.totalorder %s92, %s95
      %p104 = scmp.eq.s32.totalorder %s19, 1
      %p105 = por %p103, %p104
      %p106 = scmp.ne.s32.totalorder %s95, %s96
      %p107 = scmp.eq.s32.totalorder %s19, 0
      %p108 = por %p106, %p107
      %p109 = scmp.ne.s32.totalorder %s95, %s96
      %p110 = scmp.eq.s32.totalorder %s20, 1
      %p111 = por %p109, %p110
      %p113 = scmp.ne.s32.totalorder %s96, %s112
      %p114 = scmp.eq.s32.totalorder %s20, 0
      %p115 = por %p113, %p114
      %p116 = scmp.le.s32.totalorder 1, %s14
      %p117 = scmp.lt.s32.totalorder %s14, 3
      %p118 = pnand %p116, %p117
      %p119 = pneg %p118
      // Predicated region
      $region9: #{tpu_custom_call.1} parent=5 // pred_check
        _
      $region10: #{tpu_custom_call.1} parent=5 // pred_check_branch
        %121 = sbr.rel (%p118) target = $region12
      $region11: #{tpu_custom_call.1} parent=5 // pred_region
        %s122 = ssub.s32 %s14, 1
        // Predicated region
        $region13: #{tpu_custom_call.1} parent=11 // pred_check
          %p123 = pneg %p52
        $region14: #{tpu_custom_call.1} parent=11 // pred_check_branch
          %125 = sbr.rel (%p123) target = $region16
        $region15: #{tpu_custom_call.1} parent=11 // pred_region
          %p126 = scmp.lt.s32.totalorder %s23, 0
          %s127 = scalar_select %p126, %s23, 0
          %s128 = smul.addr %s127, 2
          %s129 = scalar_lea.vmem %s0, %s128
        $region16: #{tpu_custom_call.1} parent=11 // pred_fallthru
          _
      $region12: #{tpu_custom_call.1} parent=5 // pred_fallthru
        _
      %p130 = scmp.lt.s32.totalorder %s14, 2
      // Predicated region
      $region17: #{tpu_custom_call.1} parent=5 // pred_check
        %p131 = pneg %p130
      $region18: #{tpu_custom_call.1} parent=5 // pred_check_branch
        %133 = sbr.rel (%p131) target = $region20
      $region19: #{tpu_custom_call.1} parent=5 // pred_region
        // Predicated region
        $region21: #{tpu_custom_call.1} parent=19 // pred_check
          %p134 = pneg %p74
        $region22: #{tpu_custom_call.1} parent=19 // pred_check_branch
          %136 = sbr.rel (%p134) target = $region24
        $region23: #{tpu_custom_call.1} parent=19 // pred_region
          %s137 = sand.u32 %s64, 1
          %s138 = scalar_lea.sflag [#allocation3], %s137
          %s139 = sand.u32 %s64, 1
          %s140 = smul.addr %s139, 8
          %s141 = scalar_lea.vmem [#allocation2], %s140
          %s142 = smul.u32 4, %s22
          %s144 = ssub.s32 128, 128
          %145 = vsyncadd %s138, %s144
          %s146 = smul.addr %s21, 8
          %s147 = sadd.s32 %s142, %s146
          %s148 = smul.addr %s147, 32
          %s149 = scalar_lea.hbm %s1, %s148
          %s151 = sshll.u32 %s141, 4
          %s152 = int_to_ptr.vmem [resolvable:$true] %s151
          %154 = dma.hbm_to_vmem [thread:$0]  %s149, 128, %s152, %s138
        $region24: #{tpu_custom_call.1} parent=19 // pred_fallthru
          _
      $region20: #{tpu_custom_call.1} parent=5 // pred_fallthru
        _
      %p155 = scmp.le.s32.totalorder 1, %s14
      %p156 = scmp.lt.s32.totalorder %s14, 3
      %p157 = pnand %p155, %p156
      %p158 = pneg %p157
      // Predicated region
      $region25: #{tpu_custom_call.1} parent=5 // pred_check
        _
      $region26: #{tpu_custom_call.1} parent=5 // pred_check_branch
        %160 = sbr.rel (%p157) target = $region28
      $region27: #{tpu_custom_call.1} parent=5 // pred_region
        %s161 = ssub.s32 %s14, 1
        %s162 = sand.u32 %s67, 1
        %s163 = scalar_lea.sflag [#allocation3], %s162
        %s164 = sand.u32 %s67, 1
        %s165 = smul.addr %s164, 8
        %s166 = scalar_lea.vmem [#allocation2], %s165
        // Predicated region
        $region29: #{tpu_custom_call.1} parent=27 // pred_check
          %p167 = pneg %p80
        $region30: #{tpu_custom_call.1} parent=27 // pred_check_branch
          %169 = sbr.rel (%p167) target = $region32
        $region31: #{tpu_custom_call.1} parent=27 // pred_region
          %170 = dma.done %s163, 128
        $region32: #{tpu_custom_call.1} parent=27 // pred_fallthru
          _
        %p171 = scmp.lt.s32.totalorder %s23, 0
        %s172 = scalar_select %p171, %s23, 0
        %s173 = smul.addr %s172, 2
        %s174 = scalar_lea.vmem %s0, %s173
        %p175 = pneg %p52
        %p176 = pneg %p49
        %s177 = sand.u32 %s67, 1
        %s178 = scalar_lea.sflag [#allocation3], %s177
        %s179 = sand.u32 %s67, 1
        %s180 = smul.addr %s179, 8
        %s181 = scalar_lea.vmem [#allocation2], %s180
        %p182 = pneg %p80
        %p183 = pneg %p77
        %p184 = pneg %p108
        %p185 = pneg %p105
        %s186 = sand.u32 %s95, 1
        %s187 = scalar_lea.sflag [#allocation4], %s186
        %s188 = sand.u32 %s95, 1
        %s189 = smul.addr %s188, 8
        %s190 = scalar_lea.vmem [#allocation5], %s189
        %p191 = scmp.lt.s32.totalorder %s23, 0
        %s192 = scalar_select %p191, %s23, 0
        %s193 = smul.addr %s192, 2
        %s194 = scalar_lea.vmem %s0, %s193
        %s195 = smul.u32 4, %s24
        %s196 = smul.u32 4, %s24
        %v197 = vld [vmem:[%s166] sm:$0xff]
        %v198 = vld [vmem:[%s194] sm:$0x3]
        %200 = vset.pattern.permute.xlu0 0
        %201 = vperm.xlu0 %200, %v198
        %v202 = vpop.permute.xlu0 %201
        %v204 = vunpack.c.l.s4 269488144
        %v205 = vunpack.c.0.s8 %v204
        %v206 = vlaneseq
        %v207 = vshrl.u32 %v206, 7
        %v208 = vsub.s32 %v205, %v207
        %v209 = vrot.slane %v202, %v208
        %v211 = vmul.f32 %v197, %v209
        %212 = vst [vmem:[%s190] sm:$0xff] %v211
        %s213 = sand.u32 %s95, 1
        %s214 = scalar_lea.sflag [#allocation4], %s213
        %s215 = sand.u32 %s95, 1
        %s216 = smul.addr %s215, 8
        %s217 = scalar_lea.vmem [#allocation5], %s216
        // Predicated region
        $region33: #{tpu_custom_call.1} parent=27 // pred_check
          %p218 = pneg %p105
        $region34: #{tpu_custom_call.1} parent=27 // pred_check_branch
          %220 = sbr.rel (%p218) target = $region36
        $region35: #{tpu_custom_call.1} parent=27 // pred_region
          %s221 = smul.u32 4, %s24
          %s223 = ssub.s32 128, 128
          %224 = vsyncadd %s214, %s223
          %s225 = smul.addr %s23, 8
          %s226 = sadd.s32 %s221, %s225
          %s227 = smul.addr %s226, 32
          %s228 = scalar_lea.hbm %s2, %s227
          %s230 = sshll.u32 %s217, 4
          %s231 = int_to_ptr.vmem [resolvable:$true] %s230
          %233 = dma.vmem_to_hbm [thread:$0]  %s231, 128, %s228, %s214
        $region36: #{tpu_custom_call.1} parent=27 // pred_fallthru
          _
      $region28: #{tpu_custom_call.1} parent=5 // pred_fallthru
        _
      %p234 = scmp.le.s32.totalorder 2, %s14
      // Predicated region
      $region37: #{tpu_custom_call.1} parent=5 // pred_check
        %p235 = pneg %p234
      $region38: #{tpu_custom_call.1} parent=5 // pred_check_branch
        %237 = sbr.rel (%p235) target = $region40
      $region39: #{tpu_custom_call.1} parent=5 // pred_region
        %s238 = ssub.s32 %s14, 2
        // Predicated region
        $region41: #{tpu_custom_call.1} parent=39 // pred_check
          %p239 = pneg %p111
        $region42: #{tpu_custom_call.1} parent=39 // pred_check_branch
          %241 = sbr.rel (%p239) target = $region44
        $region43: #{tpu_custom_call.1} parent=39 // pred_region
          %s242 = sand.u32 %s96, 1
          %s243 = scalar_lea.sflag [#allocation4], %s242
          %s244 = sand.u32 %s96, 1
          %s245 = smul.addr %s244, 8
          %s246 = scalar_lea.vmem [#allocation5], %s245
          %247 = dma.done %s243, 128
        $region44: #{tpu_custom_call.1} parent=39 // pred_fallthru
          _
      $region40: #{tpu_custom_call.1} parent=5 // pred_fallthru
        _
    $region6: #{tpu_custom_call.1} parent=1 // loop_footer
      %s18 = sadd.s32 1, %s14
    $region7: #{tpu_custom_call.1} parent=1 // loop_footer_branch
      %13 = sbr.rel target = $region3
    $region8: #{tpu_custom_call.1} parent=1 // loop_exit
      _
    %248 = vsyncpa [#allocation3], 1
    %s249 = scalar_lea.sflag [#allocation3], 1
    %250 = vsyncpa %s249, 1
    %251 = vsyncpa [#allocation4], 1
    %s252 = scalar_lea.sflag [#allocation4], 1
    %253 = vsyncpa %s252, 1

</llo_original>
